<compile_context>
chip_gen: v7x
topology: tpu7x:2x2x1
jax: 0.10.0
libtpu: 0.0.40
codegen_flags: <defaults>
</compile_context>

<pallas_src>
import jax
import jax.numpy as jnp
import numpy as np
from jax.experimental import pallas as pl
from jax.experimental.pallas import tpu as pltpu

KH = KW = 4
STRIDE = 2
PAD = 1
LANE = 128
SUBLANE = 8


def _cdiv(a, b):
    return (a + b - 1) // b


def _round_up(x, m):
    return _cdiv(x, m) * m


def _conv_block_kernel(x_ref, w_ref, b_ref, o_ref):
    # x_ref: (1, TH+1, Wb, C4)  space-to-depth'd block rows incl. bottom halo (bf16)
    # w_ref: (2, 2, C4, Cp)     per-(dh, dw) weight matrices (bf16)
    # b_ref: (1, Cp)            f32 bias
    # o_ref: (1, TH*Wo, Cp)     flat (row-major over (TH, Wo)) output tile
    _, th_p1, wb, c4 = x_ref.shape
    th = th_p1 - 1
    wo = wb - 1                 # Wo_pad, a multiple of 8 => aligned reshapes
    m = th * wo

    rows = x_ref[0]             # (TH+1, Wb, C4)
    top = rows[0:th]            # dh = 0 block rows
    bot = rows[1:th + 1]        # dh = 1 block rows (halo comes with the block)

    acc = jnp.dot(top[:, 0:wo, :].reshape(m, c4), w_ref[0, 0],
                  preferred_element_type=jnp.float32)
    acc += jnp.dot(top[:, 1:wo + 1, :].reshape(m, c4), w_ref[0, 1],
                   preferred_element_type=jnp.float32)
    acc += jnp.dot(bot[:, 0:wo, :].reshape(m, c4), w_ref[1, 0],
                   preferred_element_type=jnp.float32)
    acc += jnp.dot(bot[:, 1:wo + 1, :].reshape(m, c4), w_ref[1, 1],
                   preferred_element_type=jnp.float32)
    acc += b_ref[...]           # (1, Cp) f32 bias, added once per tile
    o_ref[0] = acc.astype(o_ref.dtype)


def _vmem_capacity_bytes():
    """Best-effort physical VMEM capacity of the local TPU generation."""
    try:
        cap = getattr(pltpu.get_tpu_info(), "vmem_capacity_bytes", None)
        if cap:
            return int(cap)
    except Exception:
        pass
    try:
        kind = jax.devices()[0].device_kind.lower()
    except Exception:
        kind = ""
    if "v7" in kind:
        return 64 * 1024 * 1024        # v7x: 64 MiB per TensorCore
    return 128 * 1024 * 1024           # v4/v5e/v6e: 128 MiB


def _pick_row_tile(Ho, Wo_pad, Wb_pad, C4, Cout_pad, in_itemsize, out_itemsize,
                   tile_budget_bytes, max_m=4096):
    """Largest TH whose tile (incl. dbl-buffering, acc, relayout temps) fits budget."""
    best = 1
    for th in range(1, Ho + 1):
        if th * Wo_pad > max_m:
            break
        in_bytes = 2 * (th + 1) * Wb_pad * C4 * in_itemsize           # dbl-buffered lhs
        out_bytes = 2 * th * Wo_pad * Cout_pad * out_itemsize         # dbl-buffered out
        tmp_bytes = th * Wo_pad * (Cout_pad * 4 + 2 * C4 * in_itemsize)  # acc + temps
        if in_bytes + out_bytes + tmp_bytes <= tile_budget_bytes:
            best = th
    return best


def downsample_inout(x_nchw, weight_oihw, bias, compute_dtype=jnp.bfloat16):
    """Forward pass of Downsample_inout (Conv2d k=4, s=2, p=1), NCHW in/out."""
    N, Cin, H, W = x_nchw.shape
    Cout = weight_oihw.shape[0]
    assert H % 2 == 0 and W % 2 == 0, "k=4/s=2/p=1 downsample expects even H, W"
    Ho, Wo = H // STRIDE, W // STRIDE
    Wo_pad = _round_up(Wo, SUBLANE)       # sublane-aligned output width
    Hb, Wb_pad = Ho + 1, Wo_pad + 1       # padded input in 2x2-block coordinates
    C4 = 4 * Cin                          # 2x2 pixel block flattened with channels
    Cout_pad = _round_up(Cout, LANE)      # lane-dense output stores

    out_dtype = x_nchw.dtype
    in_itemsize = np.dtype(compute_dtype).itemsize
    out_itemsize = np.dtype(out_dtype).itemsize

    # ---- generation-aware VMEM budget & row-tile size ----
    vmem_cap = _vmem_capacity_bytes()
    vmem_limit = min(int(vmem_cap * 0.7), 96 * 1024 * 1024)   # ~45 MiB v7x, ~90 MiB v5e/v6e
    w_bytes_single = 2 * 2 * C4 * Cout_pad * in_itemsize
    single_buffer_weights = w_bytes_single > 4 * 1024 * 1024  # grid-invariant anyway
    w_resident = w_bytes_single * (1 if single_buffer_weights else 2)
    bias_resident = 2 * Cout_pad * 4
    tile_budget = max(vmem_limit - w_resident - bias_resident - 4 * 1024 * 1024,
                      1 * 1024 * 1024)

    TH = _pick_row_tile(Ho, Wo_pad, Wb_pad, C4, Cout_pad,
                        in_itemsize, out_itemsize, tile_budget)
    G = _cdiv(Ho, TH)
    TH = _cdiv(Ho, G)                     # balance tiles when Ho is not divisible

    # ---- layout plumbing (plain JAX, ~1x activation traffic, no im2col blowup) ----
    xc = x_nchw.astype(compute_dtype)                       # cast once, up-front
    x_nhwc = jnp.transpose(xc, (0, 2, 3, 1))
    # single pad: conv padding + right-pad so Wo_pad output columns exist
    x_p = jnp.pad(x_nhwc, ((0, 0), (PAD, PAD),
                           (PAD, PAD + 2 * (Wo_pad - Wo)), (0, 0)))
    # space-to-depth into non-overlapping 2x2 pixel blocks: (N, Hb, Wb_pad, C4)
    xb = x_p.reshape(N, Hb, 2, Wb_pad, 2, Cin)
    xb = jnp.transpose(xb, (0, 1, 3, 2, 4, 5)).reshape(N, Hb, Wb_pad, C4)
    # pack TH output block-rows + their bottom halo row into each tile
    # (clamped gather => also handles Ho not divisible by TH; ~1/TH extra HBM)
    row_idx = jnp.minimum(
        jnp.arange(G)[:, None] * TH + jnp.arange(TH + 1)[None, :], Hb - 1)
    xg = jnp.take(xb, row_idx, axis=1)                      # (N, G, TH+1, Wb_pad, C4)
    xg = xg.reshape(N * G, TH + 1, Wb_pad, C4)

    # weights: (Cout, Cin, 4, 4) -> (dh, dw, (r, c, cin), cout), lane-padded, bf16
    w_blk = weight_oihw.reshape(Cout, Cin, 2, 2, 2, 2)
    w_blk = jnp.transpose(w_blk, (2, 4, 3, 5, 1, 0)).reshape(2, 2, C4, Cout)
    w_blk = jnp.pad(w_blk, ((0, 0), (0, 0), (0, 0), (0, Cout_pad - Cout)))
    w_blk = w_blk.astype(compute_dtype)
    b_mat = jnp.pad(bias.astype(jnp.float32), (0, Cout_pad - Cout)).reshape(1, Cout_pad)

    w_spec_kwargs = {}
    if single_buffer_weights:
        # weights are grid-invariant: single-buffer them to halve their VMEM footprint
        w_spec_kwargs = dict(pipeline_mode=pl.Buffered(1))

    grid = (N * G,)
    out_flat = pl.pallas_call(
        _conv_block_kernel,
        out_shape=jax.ShapeDtypeStruct((N * G, TH * Wo_pad, Cout_pad), out_dtype),
        grid_spec=pltpu.PrefetchScalarGridSpec(
            num_scalar_prefetch=0,
            grid=grid,
            in_specs=[
                # one tile = TH output block-rows + halo row, full width
                pl.BlockSpec((1, TH + 1, Wb_pad, C4), lambda g: (g, 0, 0, 0)),
                # VMEM-resident weights + bias
                pl.BlockSpec((2, 2, C4, Cout_pad), lambda g: (0, 0, 0, 0),
                             **w_spec_kwargs),
                pl.BlockSpec((1, Cout_pad), lambda g: (0, 0)),
            ],
            out_specs=pl.BlockSpec((1, TH * Wo_pad, Cout_pad), lambda g: (g, 0, 0)),
        ),
        compiler_params=pltpu.CompilerParams(
            dimension_semantics=("parallel",),
            vmem_limit_bytes=vmem_limit,
        ),
    )(xg, w_blk, b_mat)

    # free reshapes/slices back to (N, Cout, Ho, Wo); padding lanes/rows/cols dropped
    out = out_flat.reshape(N, G * TH, Wo_pad, Cout_pad)[:, :Ho, :Wo, :Cout]
    return jnp.transpose(out, (0, 3, 1, 2)).astype(out_dtype)


if __name__ == "__main__":
    key = jax.random.PRNGKey(0)
    k_x, k_w, k_b = jax.random.split(key, 3)

    N, Cin, H, W = 2, 4, 16, 16
    Cout = 8

    x = jax.random.normal(k_x, (N, Cin, H, W), dtype=jnp.float32)
    # deterministic synthetic parameters (PyTorch default init is uniform)
    fan_in = Cin * KH * KW
    bound = 1.0 / np.sqrt(fan_in)
    weight = jax.random.uniform(k_w, (Cout, Cin, KH, KW), jnp.float32, -bound, bound)
    bias = jax.random.uniform(k_b, (Cout,), jnp.float32, -bound, bound)

    out = jax.jit(downsample_inout)(x, weight, bias)
    out = jax.block_until_ready(out)

    # reference: f32 conv on bf16-rounded operands (kernel feeds the MXU bf16,
    # accumulates in f32), so only summation-order differences remain.
    xr = x.astype(jnp.bfloat16).astype(jnp.float32)
    wr = weight.astype(jnp.bfloat16).astype(jnp.float32)
    ref = jax.lax.conv_general_dilated(
        xr, wr,
        window_strides=(STRIDE, STRIDE),
        padding=((PAD, PAD), (PAD, PAD)),
        dimension_numbers=("NCHW", "OIHW", "NCHW"),
        precision=jax.lax.Precision.HIGHEST,
    ) + bias.reshape(1, Cout, 1, 1)
    ref = jax.block_until_ready(ref)

    assert out.shape == (N, Cout, H // 2, W // 2), out.shape
    np.testing.assert_allclose(np.asarray(out, dtype=np.float32), np.asarray(ref),
                               rtol=1e-3, atol=1e-3)

    print("KERNEL_OK")
</pallas_src>

<mosaic_0001>
module attributes {stable_mosaic.version = 11 : i64} {
  func.func @_conv_block_kernel(%arg0: i32, %arg1: memref<1x9x9x16xbf16, #tpu.memory_space<vmem>>, %arg2: memref<2x2x16x128xbf16, #tpu.memory_space<vmem>>, %arg3: memref<1x128xf32, #tpu.memory_space<vmem>>, %arg4: memref<1x64x128xf32, #tpu.memory_space<vmem>>) attributes {dimension_semantics = [#tpu.dimension_semantics<parallel>], iteration_bounds = array<i64: 2>, scalar_prefetch = 0 : i64, scratch_operands = 0 : i64, tpu.core_type = #tpu.core_type<tc>, window_params = [{transform_indices = @transform_0, window_bounds = array<i64: 1, 9, 9, 16>}, {pipeline_mode = #tpu.pipeline_mode<synchronous>, transform_indices = @transform_1, window_bounds = array<i64: 2, 2, 16, 128>}, {pipeline_mode = #tpu.pipeline_mode<synchronous>, transform_indices = @transform_2, window_bounds = array<i64: 1, 128>}, {transform_indices = @transform_3, window_bounds = array<i64: 1, 64, 128>}]} {
    %c0 = arith.constant 0 : index
    %c0_0 = arith.constant 0 : index
    %c0_1 = arith.constant 0 : index
    %c0_2 = arith.constant 0 : index
    %0 = vector.load %arg1[%c0, %c0_0, %c0_1, %c0_2] : memref<1x9x9x16xbf16, #tpu.memory_space<vmem>>, vector<1x9x9x16xbf16>
    %1 = vector.shape_cast %0 : vector<1x9x9x16xbf16> to vector<9x9x16xbf16>
    %2 = vector.extract_strided_slice %1 {offsets = [0, 0, 0], sizes = [8, 9, 16], strides = [1, 1, 1]} : vector<9x9x16xbf16> to vector<8x9x16xbf16>
    %3 = vector.extract_strided_slice %1 {offsets = [1, 0, 0], sizes = [8, 9, 16], strides = [1, 1, 1]} : vector<9x9x16xbf16> to vector<8x9x16xbf16>
    %4 = vector.extract_strided_slice %2 {offsets = [0, 0, 0], sizes = [8, 8, 16], strides = [1, 1, 1]} : vector<8x9x16xbf16> to vector<8x8x16xbf16>
    %5 = vector.shape_cast %4 : vector<8x8x16xbf16> to vector<64x16xbf16>
    %c0_3 = arith.constant 0 : index
    %c0_4 = arith.constant 0 : index
    %c0_5 = arith.constant 0 : index
    %c0_6 = arith.constant 0 : index
    %6 = vector.load %arg2[%c0_3, %c0_4, %c0_5, %c0_6] : memref<2x2x16x128xbf16, #tpu.memory_space<vmem>>, vector<1x1x16x128xbf16>
    %7 = vector.shape_cast %6 : vector<1x1x16x128xbf16> to vector<16x128xbf16>
    %cst = arith.constant dense<0.000000e+00> : vector<64x128xf32>
    %8 = tpu.matmul %5, %7, %cst {dimension_numbers = #tpu.dot_dimension_numbers<[1], [0], [0], [1], [0, 0, 1, 1], [], []>} : vector<64x16xbf16>, vector<16x128xbf16>, vector<64x128xf32> -> vector<64x128xf32>
    %9 = vector.extract_strided_slice %2 {offsets = [0, 1, 0], sizes = [8, 8, 16], strides = [1, 1, 1]} : vector<8x9x16xbf16> to vector<8x8x16xbf16>
    %10 = vector.shape_cast %9 : vector<8x8x16xbf16> to vector<64x16xbf16>
    %c0_7 = arith.constant 0 : index
    %c1 = arith.constant 1 : index
    %c0_8 = arith.constant 0 : index
    %c0_9 = arith.constant 0 : index
    %11 = vector.load %arg2[%c0_7, %c1, %c0_8, %c0_9] : memref<2x2x16x128xbf16, #tpu.memory_space<vmem>>, vector<1x1x16x128xbf16>
    %12 = vector.shape_cast %11 : vector<1x1x16x128xbf16> to vector<16x128xbf16>
    %cst_10 = arith.constant dense<0.000000e+00> : vector<64x128xf32>
    %13 = tpu.matmul %10, %12, %cst_10 {dimension_numbers = #tpu.dot_dimension_numbers<[1], [0], [0], [1], [0, 0, 1, 1], [], []>} : vector<64x16xbf16>, vector<16x128xbf16>, vector<64x128xf32> -> vector<64x128xf32>
    %14 = arith.addf %8, %13 : vector<64x128xf32>
    %15 = vector.extract_strided_slice %3 {offsets = [0, 0, 0], sizes = [8, 8, 16], strides = [1, 1, 1]} : vector<8x9x16xbf16> to vector<8x8x16xbf16>
    %16 = vector.shape_cast %15 : vector<8x8x16xbf16> to vector<64x16xbf16>
    %c1_11 = arith.constant 1 : index
    %c0_12 = arith.constant 0 : index
    %c0_13 = arith.constant 0 : index
    %c0_14 = arith.constant 0 : index
    %17 = vector.load %arg2[%c1_11, %c0_12, %c0_13, %c0_14] : memref<2x2x16x128xbf16, #tpu.memory_space<vmem>>, vector<1x1x16x128xbf16>
    %18 = vector.shape_cast %17 : vector<1x1x16x128xbf16> to vector<16x128xbf16>
    %cst_15 = arith.constant dense<0.000000e+00> : vector<64x128xf32>
    %19 = tpu.matmul %16, %18, %cst_15 {dimension_numbers = #tpu.dot_dimension_numbers<[1], [0], [0], [1], [0, 0, 1, 1], [], []>} : vector<64x16xbf16>, vector<16x128xbf16>, vector<64x128xf32> -> vector<64x128xf32>
    %20 = arith.addf %14, %19 : vector<64x128xf32>
    %21 = vector.extract_strided_slice %3 {offsets = [0, 1, 0], sizes = [8, 8, 16], strides = [1, 1, 1]} : vector<8x9x16xbf16> to vector<8x8x16xbf16>
    %22 = vector.shape_cast %21 : vector<8x8x16xbf16> to vector<64x16xbf16>
    %c1_16 = arith.constant 1 : index
    %c1_17 = arith.constant 1 : index
    %c0_18 = arith.constant 0 : index
    %c0_19 = arith.constant 0 : index
    %23 = vector.load %arg2[%c1_16, %c1_17, %c0_18, %c0_19] : memref<2x2x16x128xbf16, #tpu.memory_space<vmem>>, vector<1x1x16x128xbf16>
    %24 = vector.shape_cast %23 : vector<1x1x16x128xbf16> to vector<16x128xbf16>
    %cst_20 = arith.constant dense<0.000000e+00> : vector<64x128xf32>
    %25 = tpu.matmul %22, %24, %cst_20 {dimension_numbers = #tpu.dot_dimension_numbers<[1], [0], [0], [1], [0, 0, 1, 1], [], []>} : vector<64x16xbf16>, vector<16x128xbf16>, vector<64x128xf32> -> vector<64x128xf32>
    %26 = arith.addf %20, %25 : vector<64x128xf32>
    %c0_21 = arith.constant 0 : index
    %c0_22 = arith.constant 0 : index
    %27 = vector.load %arg3[%c0_21, %c0_22] : memref<1x128xf32, #tpu.memory_space<vmem>>, vector<1x128xf32>
    %28 = vector.broadcast %27 : vector<1x128xf32> to vector<64x128xf32>
    %29 = arith.addf %26, %28 : vector<64x128xf32>
    %c0_23 = arith.constant 0 : index
    %c0_24 = arith.constant 0 : index
    %c0_25 = arith.constant 0 : index
    %30 = vector.load %arg4[%c0_23, %c0_24, %c0_25] : memref<1x64x128xf32, #tpu.memory_space<vmem>>, vector<1x64x128xf32>
    %31 = vector.shape_cast %30 : vector<1x64x128xf32> to vector<64x128xf32>
    %32 = vector.shape_cast %29 : vector<64x128xf32> to vector<1x64x128xf32>
    tpu.vector_store %arg4[%c0_23, %c0_24, %c0_25], %32 {strides = array<i32>} : memref<1x64x128xf32, #tpu.memory_space<vmem>>, vector<1x64x128xf32>,
    return
  }
  func.func @transform_0(%arg0: i32) -> (i32, i32, i32, i32) {
    %c0_i32 = arith.constant 0 : i32
    %c0_i32_0 = arith.constant 0 : i32
    %c0_i32_1 = arith.constant 0 : i32
    %c0_i32_2 = arith.constant 0 : i32
    return %arg0, %c0_i32, %c0_i32_0, %c0_i32_1 : i32, i32, i32, i32
  }
  func.func @transform_1(%arg0: i32) -> (i32, i32, i32, i32) {
    %c0_i32 = arith.constant 0 : i32
    %c0_i32_0 = arith.constant 0 : i32
    %c0_i32_1 = arith.constant 0 : i32
    %c0_i32_2 = arith.constant 0 : i32
    %c0_i32_3 = arith.constant 0 : i32
    return %c0_i32, %c0_i32_0, %c0_i32_1, %c0_i32_2 : i32, i32, i32, i32
  }
  func.func @transform_2(%arg0: i32) -> (i32, i32) {
    %c0_i32 = arith.constant 0 : i32
    %c0_i32_0 = arith.constant 0 : i32
    %c0_i32_1 = arith.constant 0 : i32
    return %c0_i32, %c0_i32_0 : i32, i32
  }
  func.func @transform_3(%arg0: i32) -> (i32, i32, i32) {
    %c0_i32 = arith.constant 0 : i32
    %c0_i32_0 = arith.constant 0 : i32
    %c0_i32_1 = arith.constant 0 : i32
    return %arg0, %c0_i32, %c0_i32_0 : i32, i32, i32
  }
}

</mosaic_0001>

<llo_original>
// kernel: downsample_inout.1
$region0: #{downsample_inout.1}
  #allocation0 [shape = 'u32[]', space=smem, size = 0x4, offset = 0x4, fixed_abs, tag = 'smem constant byte address 0x4 - core index']
  #allocation1 [shape = 'u32[144,128]{1,0:T(1,128)}', space=vmem, size = 0x12000, scoped, tag = 'internal scratch']
  %s0 = inlined_call_operand.hbm [shape: bf16[2,9,9,16], index: 0, kind: input, shape index: {}]
  %s1 = inlined_call_operand.hbm [shape: bf16[2,2,16,128], index: 1, kind: input, shape index: {}]
  %s2 = inlined_call_operand.hbm [shape: f32[1,128], index: 2, kind: input, shape index: {}]
  %s3 = inlined_call_operand.hbm [shape: f32[2,64,128], index: 3, kind: output, shape index: {}]
  %s4 = sld [smem:[#allocation0]]
  $region57: #{downsample_inout.1} parent=0
    _
  %s6 = ssub.s32 1, %s4
  %s7 = scalar_select 0, %s6, %s4
  $region1: #{downsample_inout.1} parent=0
    #allocation2 [shape = 'u8[73728]{0}', space=vmem, size = 0x12000, scoped, tag = 'input window, operand 0']
    #allocation3 [shape = 's32[2]{0}', space=sflag, size = 0x8, scoped, tag = 'scoped memory for downsample_inout.1']
    #allocation4 [shape = 's32[2]{0}', space=sflag, size = 0x8, scoped, tag = 'scoped memory for downsample_inout.1']
    #allocation5 [shape = 'u8[16384]{0}', space=vmem, size = 0x4000, scoped, tag = 'input window, operand 1, single buffered']
    #allocation6 [shape = 's32[1]{0}', space=sflag, size = 0x4, scoped, tag = 'scoped memory for downsample_inout.1']
    #allocation7 [shape = 'u8[512]{0}', space=vmem, size = 0x400, scoped, tag = 'input window, operand 2, single buffered']
    #allocation8 [shape = 'u8[65536]{0}', space=vmem, size = 0x10000, scoped, tag = 'output window, operand 0']
    %8 = vsyncpa [#allocation3], 0
    %s9 = scalar_lea.sflag [#allocation3], 1
    %10 = vsyncpa %s9, 0
    %11 = vsyncpa [#allocation6], 0
    %12 = vsyncpa [#allocation4], 0
    %s13 = scalar_lea.sflag [#allocation4], 1
    %14 = vsyncpa %s13, 0
    loop: start=0, step=1, limit=4
    $region2: #{downsample_inout.1} parent=1 // loop_pre_header
      _
    $region3: #{downsample_inout.1} parent=1 // loop_header
      %s16 = sphi 0, %s20
      %p17 = scmp.ge.s32.totalorder %s16, 4
      %s26 = sphi 0, %s28
      %s29 = sphi 0, %s26
      %s30 = sphi 0, %s29
      %s46 = sphi 0, %s30
      %s50 = sphi 0, %s50
      %s52 = sphi 0, %s50
      %s53 = sphi 0, %s52
      %s67 = sphi 0, %s53
      %s71 = sphi 0, %s71
      %s73 = sphi 0, %s71
      %s74 = sphi 0, %s73
      %s88 = sphi 0, %s74
      %s94 = sphi 0, %s96
      %s97 = sphi 0, %s94
      %s98 = sphi 0, %s97
      %s114 = sphi 0, %s98
    $region4: #{downsample_inout.1} parent=1 // loop_header_branch
      %19 = sbr.rel (%p17) target = $region8
    $region5: #{downsample_inout.1} parent=1 // loop_body
      %s21 = ssub.s32 %s16, 1
      %s22 = ssub.s32 %s16, 2
      %s23 = sadd.s32 %s16, 1
      %s24 = ssub.s32 %s16, %s23
      %p25 = scmp.eq.s32.totalorder %s24, 0
      %s27 = sadd.s32 %s26, 1
      %s28 = scalar_select %p25, %s26, %s27
      %p31 = pneg %p25
      %p32 = scmp.eq.s32.totalorder %s16, 1
      %p33 = por %p31, %p32
      %p34 = scmp.ne.s32.totalorder %s26, %s29
      %p35 = scmp.eq.s32.totalorder %s16, 0
      %p36 = por %p34, %p35
      %p37 = scmp.ne.s32.totalorder %s26, %s29
      %p38 = scmp.eq.s32.totalorder %s21, 1
      %p39 = por %p37, %p38
      %p40 = scmp.ne.s32.totalorder %s29, %s30
      %p41 = scmp.eq.s32.totalorder %s21, 0
      %p42 = por %p40, %p41
      %p43 = scmp.ne.s32.totalorder %s29, %s30
      %p44 = scmp.eq.s32.totalorder %s22, 1
      %p45 = por %p43, %p44
      %p47 = scmp.ne.s32.totalorder %s30, %s46
      %p48 = scmp.eq.s32.totalorder %s22, 0
      %p49 = por %p47, %p48
      %s51 = sadd.s32 %s50, 1
      %p54 = scmp.eq.s32.totalorder %s16, 1
      %p55 = scmp.ne.s32.totalorder %s50, %s52
      %p56 = scmp.eq.s32.totalorder %s16, 0
      %p57 = por %p55, %p56
      %p58 = scmp.ne.s32.totalorder %s50, %s52
      %p59 = scmp.eq.s32.totalorder %s21, 1
      %p60 = por %p58, %p59
      %p61 = scmp.ne.s32.totalorder %s52, %s53
      %p62 = scmp.eq.s32.totalorder %s21, 0
      %p63 = por %p61, %p62
      %p64 = scmp.ne.s32.totalorder %s52, %s53
      %p65 = scmp.eq.s32.totalorder %s22, 1
      %p66 = por %p64, %p65
      %p68 = scmp.ne.s32.totalorder %s53, %s67
      %p69 = scmp.eq.s32.totalorder %s22, 0
      %p70 = por %p68, %p69
      %s72 = sadd.s32 %s71, 1
      %p75 = scmp.eq.s32.totalorder %s16, 1
      %p76 = scmp.ne.s32.totalorder %s71, %s73
      %p77 = scmp.eq.s32.totalorder %s16, 0
      %p78 = por %p76, %p77
      %p79 = scmp.ne.s32.totalorder %s71, %s73
      %p80 = scmp.eq.s32.totalorder %s21, 1
      %p81 = por %p79, %p80
      %p82 = scmp.ne.s32.totalorder %s73, %s74
      %p83 = scmp.eq.s32.totalorder %s21, 0
      %p84 = por %p82, %p83
      %p85 = scmp.ne.s32.totalorder %s73, %s74
      %p86 = scmp.eq.s32.totalorder %s22, 1
      %p87 = por %p85, %p86
      %p89 = scmp.ne.s32.totalorder %s74, %s88
      %p90 = scmp.eq.s32.totalorder %s22, 0
      %p91 = por %p89, %p90
      %s92 = ssub.s32 %s16, %s23
      %p93 = scmp.eq.s32.totalorder %s92, 0
      %s95 = sadd.s32 %s94, 1
      %s96 = scalar_select %p93, %s94, %s95
      %p99 = pneg %p93
      %p100 = scmp.eq.s32.totalorder %s16, 1
      %p101 = por %p99, %p100
      %p102 = scmp.ne.s32.totalorder %s94, %s97
      %p103 = scmp.eq.s32.totalorder %s16, 0
      %p104 = por %p102, %p103
      %p105 = scmp.ne.s32.totalorder %s94, %s97
      %p106 = scmp.eq.s32.totalorder %s21, 1
      %p107 = por %p105, %p106
      %p108 = scmp.ne.s32.totalorder %s97, %s98
      %p109 = scmp.eq.s32.totalorder %s21, 0
      %p110 = por %p108, %p109
      %p111 = scmp.ne.s32.totalorder %s97, %s98
      %p112 = scmp.eq.s32.totalorder %s22, 1
      %p113 = por %p111, %p112
      %p115 = scmp.ne.s32.totalorder %s98, %s114
      %p116 = scmp.eq.s32.totalorder %s22, 0
      %p117 = por %p115, %p116
      %p118 = scmp.le.s32.totalorder 1, %s16
      %p119 = scmp.lt.s32.totalorder %s16, 3
      %p120 = pnand %p118, %p119
      %p121 = pneg %p120
      // Predicated region
      $region9: #{downsample_inout.1} parent=5 // pred_check
        _
      $region10: #{downsample_inout.1} parent=5 // pred_check_branch
        %123 = sbr.rel (%p120) target = $region12
      $region11: #{downsample_inout.1} parent=5 // pred_region
        %s124 = ssub.s32 %s16, 1
        // Predicated region
        $region13: #{downsample_inout.1} parent=11 // pred_check
          %p125 = pneg %p63
        $region14: #{downsample_inout.1} parent=11 // pred_check_branch
          %127 = sbr.rel (%p125) target = $region16
        $region15: #{downsample_inout.1} parent=11 // pred_region
          %s129 = ssub.s32 512, 512
          %130 = vsyncadd [#allocation6], %s129
          %s131 = sshll.u32 [#allocation5], 4
          %s132 = int_to_ptr.vmem [resolvable:$true] %s131
          %137 = dma.hbm_to_vmem [thread:$0]  %s1, 512, %s132, [#allocation6], 64, 64, 4
        $region16: #{downsample_inout.1} parent=11 // pred_fallthru
          _
        // Predicated region
        $region17: #{downsample_inout.1} parent=11 // pred_check
          %p138 = pneg %p84
        $region18: #{downsample_inout.1} parent=11 // pred_check_branch
          %140 = sbr.rel (%p138) target = $region20
        $region19: #{downsample_inout.1} parent=11 // pred_region
          %s142 = ssub.s32 16, 16
          %143 = vsyncadd [#allocation6], %s142
          %s145 = sshll.u32 [#allocation7], 4
          %s146 = int_to_ptr.vmem [resolvable:$true] %s145
          %148 = dma.hbm_to_vmem [thread:$0]  %s2, 16, %s146, [#allocation6]
        $region20: #{downsample_inout.1} parent=11 // pred_fallthru
          _
      $region12: #{downsample_inout.1} parent=5 // pred_fallthru
        _
      %p149 = scmp.lt.s32.totalorder %s16, 2
      // Predicated region
      $region21: #{downsample_inout.1} parent=5 // pred_check
        %p150 = pneg %p149
      $region22: #{downsample_inout.1} parent=5 // pred_check_branch
        %152 = sbr.rel (%p150) target = $region24
      $region23: #{downsample_inout.1} parent=5 // pred_region
        // Predicated region
        $region25: #{downsample_inout.1} parent=23 // pred_check
          %p153 = pneg %p36
        $region26: #{downsample_inout.1} parent=23 // pred_check_branch
          %155 = sbr.rel (%p153) target = $region28
        $region27: #{downsample_inout.1} parent=23 // pred_region
          %s156 = sand.u32 %s26, 1
          %s157 = scalar_lea.sflag [#allocation3], %s156
          %s158 = sand.u32 %s26, 1
          %s159 = smul.addr %s158, 72
          %s160 = scalar_lea.vmem [#allocation2], %s159
          %s162 = ssub.s32 1152, 1152
          %163 = vsyncadd %s157, %s162
          %s164 = smul.addr %s16, 18
          %s165 = smul.addr %s164, 64
          %s166 = scalar_lea.hbm %s0, %s165
          %s167 = sshll.u32 %s160, 4
          %s168 = int_to_ptr.vmem [resolvable:$true] %s167
          %173 = dma.hbm_to_vmem [thread:$0]  %s166, 1152, %s168, %s157, 64, 64, 4
        $region28: #{downsample_inout.1} parent=23 // pred_fallthru
          _
      $region24: #{downsample_inout.1} parent=5 // pred_fallthru
        _
      %p174 = scmp.le.s32.totalorder 1, %s16
      %p175 = scmp.lt.s32.totalorder %s16, 3
      %p176 = pnand %p174, %p175
      %p177 = pneg %p176
      // Predicated region
      $region29: #{downsample_inout.1} parent=5 // pred_check
        _
      $region30: #{downsample_inout.1} parent=5 // pred_check_branch
        %179 = sbr.rel (%p176) target = $region32
      $region31: #{downsample_inout.1} parent=5 // pred_region
        %s180 = ssub.s32 %s16, 1
        %s181 = sand.u32 %s29, 1
        %s182 = scalar_lea.sflag [#allocation3], %s181
        %s183 = sand.u32 %s29, 1
        %s184 = smul.addr %s183, 72
        %s185 = scalar_lea.vmem [#allocation2], %s184
        // Predicated region
        $region33: #{downsample_inout.1} parent=31 // pred_check
          %p186 = pneg %p42
        $region34: #{downsample_inout.1} parent=31 // pred_check_branch
          %188 = sbr.rel (%p186) target = $region36
        $region35: #{downsample_inout.1} parent=31 // pred_region
          %189 = dma.done %s182, 1152
        $region36: #{downsample_inout.1} parent=31 // pred_fallthru
          _
        // Predicated region
        $region37: #{downsample_inout.1} parent=31 // pred_check
          %p190 = pneg %p63
        $region38: #{downsample_inout.1} parent=31 // pred_check_branch
          %192 = sbr.rel (%p190) target = $region40
        $region39: #{downsample_inout.1} parent=31 // pred_region
          %193 = dma.done [#allocation6], 512
        $region40: #{downsample_inout.1} parent=31 // pred_fallthru
          _
        // Predicated region
        $region41: #{downsample_inout.1} parent=31 // pred_check
          %p194 = pneg %p84
        $region42: #{downsample_inout.1} parent=31 // pred_check_branch
          %196 = sbr.rel (%p194) target = $region44
        $region43: #{downsample_inout.1} parent=31 // pred_region
          %197 = dma.done [#allocation6], 16
        $region44: #{downsample_inout.1} parent=31 // pred_fallthru
          _
        %s198 = sand.u32 %s29, 1
        %s199 = scalar_lea.sflag [#allocation3], %s198
        %s200 = sand.u32 %s29, 1
        %s201 = smul.addr %s200, 72
        %s202 = scalar_lea.vmem [#allocation2], %s201
        %p203 = pneg %p42
        %p204 = pneg %p39
        %p205 = pneg %p63
        %p206 = pneg %p60
        %p207 = pneg %p84
        %p208 = pneg %p81
        %p209 = pneg %p110
        %p210 = pneg %p107
        %s211 = sand.u32 %s97, 1
        %s212 = scalar_lea.sflag [#allocation4], %s211
        %s213 = sand.u32 %s97, 1
        %s214 = smul.addr %s213, 64
        %s215 = scalar_lea.vmem [#allocation8], %s214
        %v217 = vld [vmem:[%s185] sm:$0xf]
        %v218 = vld [vmem:[%s185 + $0x4] sm:$0x1]
        %v219 = vld [vmem:[%s185 + $0x8] sm:$0xf]
        %v220 = vld [vmem:[%s185 + $0xc] sm:$0x1]
        %v221 = vld [vmem:[%s185 + $0x10] sm:$0xf]
        %v222 = vld [vmem:[%s185 + $0x14] sm:$0x1]
        %v223 = vld [vmem:[%s185 + $0x18] sm:$0xf]
        %v224 = vld [vmem:[%s185 + $0x1c] sm:$0x1]
        %v225 = vld [vmem:[%s185 + $0x20] sm:$0xf]
        %v226 = vld [vmem:[%s185 + $0x24] sm:$0x1]
        %v227 = vld [vmem:[%s185 + $0x28] sm:$0xf]
        %v228 = vld [vmem:[%s185 + $0x2c] sm:$0x1]
        %v229 = vld [vmem:[%s185 + $0x30] sm:$0xf]
        %v230 = vld [vmem:[%s185 + $0x34] sm:$0x1]
        %v231 = vld [vmem:[%s185 + $0x38] sm:$0xf]
        %v232 = vld [vmem:[%s185 + $0x3c] sm:$0x1]
        %v233 = vld [vmem:[%s185 + $0x40] sm:$0xf]
        %v234 = vld [vmem:[%s185 + $0x44] sm:$0x1]
        %v235 = vld [vmem:[#allocation5] sm:$0xf]
        %v236 = vld [vmem:[#allocation5 + $0x4] sm:$0xf]
        %vm237 = vsmask.f32 3328
        %vm238 = vsmask.f32 7440
        %vm239 = vmor %vm237, %vm238
        %v241 = vshrl.u32 %v217, 16
        %v243 = vrot.slane %v241, 4
        %v244 = vshll.u32 %v217, 16
        %v246 = vrot.slane %v244, 5
        %v247 = vor.u32 %v243, %v246
        %v248 = vrot.slane %v247, 4
        %v250 = vshll.u32 %v218, 16
        %v252 = vrot.slane %v250, 5
        %v253 = vsel %vm239, %v248, %v252
        %v255 = vshrl.u32 %v219, 16
        %v257 = vrot.slane %v255, 4
        %v258 = vshll.u32 %v219, 16
        %v260 = vrot.slane %v258, 5
        %v261 = vor.u32 %v257, %v260
        %v262 = vrot.slane %v261, 4
        %v264 = vshll.u32 %v220, 16
        %v266 = vrot.slane %v264, 5
        %v267 = vsel %vm239, %v262, %v266
        %v269 = vshrl.u32 %v221, 16
        %v271 = vrot.slane %v269, 4
        %v272 = vshll.u32 %v221, 16
        %v274 = vrot.slane %v272, 5
        %v275 = vor.u32 %v271, %v274
        %v276 = vrot.slane %v275, 4
        %v278 = vshll.u32 %v222, 16
        %v280 = vrot.slane %v278, 5
        %v281 = vsel %vm239, %v276, %v280
        %v283 = vshrl.u32 %v223, 16
        %v285 = vrot.slane %v283, 4
        %v286 = vshll.u32 %v223, 16
        %v288 = vrot.slane %v286, 5
        %v289 = vor.u32 %v285, %v288
        %v290 = vrot.slane %v289, 4
        %v292 = vshll.u32 %v224, 16
        %v294 = vrot.slane %v292, 5
        %v295 = vsel %vm239, %v290, %v294
        %v297 = vshrl.u32 %v225, 16
        %v299 = vrot.slane %v297, 4
        %v300 = vshll.u32 %v225, 16
        %v302 = vrot.slane %v300, 5
        %v303 = vor.u32 %v299, %v302
        %v304 = vrot.slane %v303, 4
        %v306 = vshll.u32 %v226, 16
        %v308 = vrot.slane %v306, 5
        %v309 = vsel %vm239, %v304, %v308
        %v311 = vshrl.u32 %v227, 16
        %v313 = vrot.slane %v311, 4
        %v314 = vshll.u32 %v227, 16
        %v316 = vrot.slane %v314, 5
        %v317 = vor.u32 %v313, %v316
        %v318 = vrot.slane %v317, 4
        %v320 = vshll.u32 %v228, 16
        %v322 = vrot.slane %v320, 5
        %v323 = vsel %vm239, %v318, %v322
        %v325 = vshrl.u32 %v229, 16
        %v327 = vrot.slane %v325, 4
        %v328 = vshll.u32 %v229, 16
        %v330 = vrot.slane %v328, 5
        %v331 = vor.u32 %v327, %v330
        %v332 = vrot.slane %v331, 4
        %v334 = vshll.u32 %v230, 16
        %v336 = vrot.slane %v334, 5
        %v337 = vsel %vm239, %v332, %v336
        %v339 = vshrl.u32 %v231, 16
        %v341 = vrot.slane %v339, 4
        %v342 = vshll.u32 %v231, 16
        %v344 = vrot.slane %v342, 5
        %v345 = vor.u32 %v341, %v344
        %v346 = vrot.slane %v345, 4
        %v348 = vshll.u32 %v232, 16
        %v350 = vrot.slane %v348, 5
        %v351 = vsel %vm239, %v346, %v350
        %s352 = scalar_lea.vmem [#allocation5], 8
        %v353 = vld [vmem:[%s352] sm:$0xf]
        %v354 = vld [vmem:[%s352 + $0x4] sm:$0xf]
        %v355 = vunpack.c.l.b16 %v253
        %v356 = vunpack.c.l.b16 %v267
        %v357 = vunpack.c.l.b16 %v281
        %v358 = vunpack.c.l.b16 %v295
        %v359 = vunpack.c.l.b16 %v309
        %v360 = vunpack.c.l.b16 %v323
        %v361 = vunpack.c.l.b16 %v337
        %v362 = vunpack.c.l.b16 %v351
        %v363 = vpack.c.b16 %v356, %v355
        %v364 = vpack.c.b16 %v358, %v357
        %v365 = vpack.c.b16 %v360, %v359
        %v366 = vpack.c.b16 %v362, %v361
        %v369 = vunpack.c.l.b16 %v353
        %v370 = vunpack.c.l.b16 %v354
        %v371 = vpack.c.b16 %v370, %v369
        %vm373 = vcmask 130048
        %v375 = vsel %vm373, %v363, 0
        %v378 = vsel %vm373, %v364, 0
        %v381 = vsel %vm373, %v365, 0
        %v384 = vsel %vm373, %v366, 0
        %386 = vmatprep.subr.bf16.mxu0 0
        %387 = vmatpush1.bf16.msra.mxu0 %v371
        %388 = vmatprep.subr.bf16.mxu0 0
        %389 = vmatpush1.bf16.msra.mxu0 0
        %390 = vmatprep.subr.bf16.mxu0 0
        %391 = vmatpush1.bf16.msra.mxu0 0
        %392 = vmatprep.subr.bf16.mxu0 0
        %393 = vmatpush1.bf16.msra.mxu0 0
        %394 = vmatprep.subr.bf16.mxu0 0
        %395 = vmatpush1.bf16.msra.mxu0 0
        %396 = vmatprep.subr.bf16.mxu0 0
        %397 = vmatpush1.bf16.msra.mxu0 0
        %398 = vmatprep.subr.bf16.mxu0 0
        %399 = vmatpush1.bf16.msra.mxu0 0
        %400 = vmatprep.subr.bf16.mxu0 0
        %401 = vmatpush1.bf16.msra.mxu0 0
        %402 = vmatprep.subr.bf16.mxu0 0
        %403 = vmatpush1.bf16.msra.mxu0 0
        %404 = vmatprep.subr.bf16.mxu0 0
        %405 = vmatpush1.bf16.msra.mxu0 0
        %406 = vmatprep.subr.bf16.mxu0 0
        %407 = vmatpush1.bf16.msra.mxu0 0
        %408 = vmatprep.subr.bf16.mxu0 0
        %409 = vmatpush1.bf16.msra.mxu0 0
        %410 = vmatprep.subr.bf16.mxu0 0
        %411 = vmatpush1.bf16.msra.mxu0 0
        %412 = vmatprep.subr.bf16.mxu0 0
        %413 = vmatpush1.bf16.msra.mxu0 0
        %414 = vmatprep.subr.bf16.mxu0 0
        %415 = vmatpush1.bf16.msra.mxu0 0
        %416 = vmatprep.subr.bf16.mxu0 0
        %417 = vmatpush1.bf16.msra.mxu0 0
        %418 = vmatprep.mubr.bf16.mxu0 0
        %419 = vmatmul.mubr.bf16.gmra.mrb[0].mxu0 %v375
        %v420 = vpop.f32.mrb[0].mxu0
        %v421 = vadd.f32 0.0, %v420
        %v422 = vpop.f32.mrb[0].mxu0
        %v423 = vpop.f32.mrb[0].mxu0
        %v424 = vadd.f32 0.0, %v423
        %v425 = vpop.f32.mrb[0].mxu0
        %426 = vmatprep.mubr.bf16.mxu0 0
        %427 = vmatmul.mubr.bf16.gmra.mrb[0].mxu0 %v378
        %v428 = vpop.f32.mrb[0].mxu0
        %v429 = vadd.f32 0.0, %v428
        %v430 = vpop.f32.mrb[0].mxu0
        %v431 = vpop.f32.mrb[0].mxu0
        %v432 = vadd.f32 0.0, %v431
        %v433 = vpop.f32.mrb[0].mxu0
        %434 = vmatprep.mubr.bf16.mxu0 0
        %435 = vmatmul.mubr.bf16.gmra.mrb[0].mxu0 %v381
        %v436 = vpop.f32.mrb[0].mxu0
        %v437 = vadd.f32 0.0, %v436
        %v438 = vpop.f32.mrb[0].mxu0
        %v439 = vpop.f32.mrb[0].mxu0
        %v440 = vadd.f32 0.0, %v439
        %v441 = vpop.f32.mrb[0].mxu0
        %442 = vmatprep.mubr.bf16.mxu0 0
        %443 = vmatmul.mubr.bf16.gmra.mrb[0].mxu0 %v384
        %v444 = vpop.f32.mrb[0].mxu0
        %v445 = vadd.f32 0.0, %v444
        %v446 = vpop.f32.mrb[0].mxu0
        %v447 = vpop.f32.mrb[0].mxu0
        %v448 = vadd.f32 0.0, %v447
        %v449 = vpop.f32.mrb[0].mxu0
        %450 = vdwg.mxu0
        %v459 = vunpack.c.l.b16 %v217
        %v460 = vunpack.c.l.b16 %v219
        %v461 = vunpack.c.l.b16 %v221
        %v462 = vunpack.c.l.b16 %v223
        %v463 = vunpack.c.l.b16 %v225
        %v464 = vunpack.c.l.b16 %v227
        %v465 = vunpack.c.l.b16 %v229
        %v466 = vunpack.c.l.b16 %v231
        %v467 = vpack.c.b16 %v460, %v459
        %v468 = vpack.c.b16 %v462, %v461
        %v469 = vpack.c.b16 %v464, %v463
        %v470 = vpack.c.b16 %v466, %v465
        %v473 = vunpack.c.l.b16 %v235
        %v474 = vunpack.c.l.b16 %v236
        %v475 = vpack.c.b16 %v474, %v473
        %v478 = vsel %vm373, %v467, 0
        %v481 = vsel %vm373, %v468, 0
        %v484 = vsel %vm373, %v469, 0
        %v487 = vsel %vm373, %v470, 0
        %489 = vmatprep.subr.bf16.mxu0 0
        %490 = vmatpush1.bf16.msra.mxu0 %v475
        %491 = vmatprep.subr.bf16.mxu0 0
        %492 = vmatpush1.bf16.msra.mxu0 0
        %493 = vmatprep.subr.bf16.mxu0 0
        %494 = vmatpush1.bf16.msra.mxu0 0
        %495 = vmatprep.subr.bf16.mxu0 0
        %496 = vmatpush1.bf16.msra.mxu0 0
        %497 = vmatprep.subr.bf16.mxu0 0
        %498 = vmatpush1.bf16.msra.mxu0 0
        %499 = vmatprep.subr.bf16.mxu0 0
        %500 = vmatpush1.bf16.msra.mxu0 0
        %501 = vmatprep.subr.bf16.mxu0 0
        %502 = vmatpush1.bf16.msra.mxu0 0
        %503 = vmatprep.subr.bf16.mxu0 0
        %504 = vmatpush1.bf16.msra.mxu0 0
        %505 = vmatprep.subr.bf16.mxu0 0
        %506 = vmatpush1.bf16.msra.mxu0 0
        %507 = vmatprep.subr.bf16.mxu0 0
        %508 = vmatpush1.bf16.msra.mxu0 0
        %509 = vmatprep.subr.bf16.mxu0 0
        %510 = vmatpush1.bf16.msra.mxu0 0
        %511 = vmatprep.subr.bf16.mxu0 0
        %512 = vmatpush1.bf16.msra.mxu0 0
        %513 = vmatprep.subr.bf16.mxu0 0
        %514 = vmatpush1.bf16.msra.mxu0 0
        %515 = vmatprep.subr.bf16.mxu0 0
        %516 = vmatpush1.bf16.msra.mxu0 0
        %517 = vmatprep.subr.bf16.mxu0 0
        %518 = vmatpush1.bf16.msra.mxu0 0
        %519 = vmatprep.subr.bf16.mxu0 0
        %520 = vmatpush1.bf16.msra.mxu0 0
        %521 = vmatprep.mubr.bf16.mxu0 0
        %522 = vmatmul.mubr.bf16.gmra.mrb[0].mxu0 %v478
        %v523 = vpop.f32.mrb[0].mxu0
        %v524 = vadd.f32 %v421, %v523
        %v525 = vpop.f32.mrb[0].mxu0
        %v526 = vpop.f32.mrb[0].mxu0
        %v527 = vadd.f32 %v424, %v526
        %v528 = vpop.f32.mrb[0].mxu0
        %529 = vmatprep.mubr.bf16.mxu0 0
        %530 = vmatmul.mubr.bf16.gmra.mrb[0].mxu0 %v481
        %v531 = vpop.f32.mrb[0].mxu0
        %v532 = vadd.f32 %v429, %v531
        %v533 = vpop.f32.mrb[0].mxu0
        %v534 = vpop.f32.mrb[0].mxu0
        %v535 = vadd.f32 %v432, %v534
        %v536 = vpop.f32.mrb[0].mxu0
        %537 = vmatprep.mubr.bf16.mxu0 0
        %538 = vmatmul.mubr.bf16.gmra.mrb[0].mxu0 %v484
        %v539 = vpop.f32.mrb[0].mxu0
        %v540 = vadd.f32 %v437, %v539
        %v541 = vpop.f32.mrb[0].mxu0
        %v542 = vpop.f32.mrb[0].mxu0
        %v543 = vadd.f32 %v440, %v542
        %v544 = vpop.f32.mrb[0].mxu0
        %545 = vmatprep.mubr.bf16.mxu0 0
        %546 = vmatmul.mubr.bf16.gmra.mrb[0].mxu0 %v487
        %v547 = vpop.f32.mrb[0].mxu0
        %v548 = vadd.f32 %v445, %v547
        %v549 = vpop.f32.mrb[0].mxu0
        %v550 = vpop.f32.mrb[0].mxu0
        %v551 = vadd.f32 %v448, %v550
        %v552 = vpop.f32.mrb[0].mxu0
        %553 = vdwg.mxu0
        %s554 = scalar_lea.vmem [#allocation5], 16
        %v555 = vld [vmem:[%s554] sm:$0xf]
        %v556 = vld [vmem:[%s554 + $0x4] sm:$0xf]
        %v558 = vunpack.c.l.b16 %v233
        %v559 = vpack.c.b16 %v461, %v460
        %v560 = vpack.c.b16 %v463, %v462
        %v561 = vpack.c.b16 %v465, %v464
        %v562 = vpack.c.b16 %v558, %v466
        %v565 = vunpack.c.l.b16 %v555
        %v566 = vunpack.c.l.b16 %v556
        %v567 = vpack.c.b16 %v566, %v565
        %v570 = vsel %vm373, %v559, 0
        %v573 = vsel %vm373, %v560, 0
        %v576 = vsel %vm373, %v561, 0
        %v579 = vsel %vm373, %v562, 0
        %581 = vmatprep.subr.bf16.mxu0 0
        %582 = vmatpush1.bf16.msra.mxu0 %v567
        %583 = vmatprep.subr.bf16.mxu0 0
        %584 = vmatpush1.bf16.msra.mxu0 0
        %585 = vmatprep.subr.bf16.mxu0 0
        %586 = vmatpush1.bf16.msra.mxu0 0
        %587 = vmatprep.subr.bf16.mxu0 0
        %588 = vmatpush1.bf16.msra.mxu0 0
        %589 = vmatprep.subr.bf16.mxu0 0
        %590 = vmatpush1.bf16.msra.mxu0 0
        %591 = vmatprep.subr.bf16.mxu0 0
        %592 = vmatpush1.bf16.msra.mxu0 0
        %593 = vmatprep.subr.bf16.mxu0 0
        %594 = vmatpush1.bf16.msra.mxu0 0
        %595 = vmatprep.subr.bf16.mxu0 0
        %596 = vmatpush1.bf16.msra.mxu0 0
        %597 = vmatprep.subr.bf16.mxu0 0
        %598 = vmatpush1.bf16.msra.mxu0 0
        %599 = vmatprep.subr.bf16.mxu0 0
        %600 = vmatpush1.bf16.msra.mxu0 0
        %601 = vmatprep.subr.bf16.mxu0 0
        %602 = vmatpush1.bf16.msra.mxu0 0
        %603 = vmatprep.subr.bf16.mxu0 0
        %604 = vmatpush1.bf16.msra.mxu0 0
        %605 = vmatprep.subr.bf16.mxu0 0
        %606 = vmatpush1.bf16.msra.mxu0 0
        %607 = vmatprep.subr.bf16.mxu0 0
        %608 = vmatpush1.bf16.msra.mxu0 0
        %609 = vmatprep.subr.bf16.mxu0 0
        %610 = vmatpush1.bf16.msra.mxu0 0
        %611 = vmatprep.subr.bf16.mxu0 0
        %612 = vmatpush1.bf16.msra.mxu0 0
        %613 = vmatprep.mubr.bf16.mxu0 0
        %614 = vmatmul.mubr.bf16.gmra.mrb[0].mxu0 %v570
        %v615 = vpop.f32.mrb[0].mxu0
        %v616 = vadd.f32 0.0, %v615
        %v617 = vpop.f32.mrb[0].mxu0
        %v618 = vpop.f32.mrb[0].mxu0
        %v619 = vadd.f32 0.0, %v618
        %v620 = vpop.f32.mrb[0].mxu0
        %621 = vmatprep.mubr.bf16.mxu0 0
        %622 = vmatmul.mubr.bf16.gmra.mrb[0].mxu0 %v573
        %v623 = vpop.f32.mrb[0].mxu0
        %v624 = vadd.f32 0.0, %v623
        %v625 = vpop.f32.mrb[0].mxu0
        %v626 = vpop.f32.mrb[0].mxu0
        %v627 = vadd.f32 0.0, %v626
        %v628 = vpop.f32.mrb[0].mxu0
        %629 = vmatprep.mubr.bf16.mxu0 0
        %630 = vmatmul.mubr.bf16.gmra.mrb[0].mxu0 %v576
        %v631 = vpop.f32.mrb[0].mxu0
        %v632 = vadd.f32 0.0, %v631
        %v633 = vpop.f32.mrb[0].mxu0
        %v634 = vpop.f32.mrb[0].mxu0
        %v635 = vadd.f32 0.0, %v634
        %v636 = vpop.f32.mrb[0].mxu0
        %637 = vmatprep.mubr.bf16.mxu0 0
        %638 = vmatmul.mubr.bf16.gmra.mrb[0].mxu0 %v579
        %v639 = vpop.f32.mrb[0].mxu0
        %v640 = vadd.f32 0.0, %v639
        %v641 = vpop.f32.mrb[0].mxu0
        %v642 = vpop.f32.mrb[0].mxu0
        %v643 = vadd.f32 0.0, %v642
        %v644 = vpop.f32.mrb[0].mxu0
        %645 = vdwg.mxu0
        %v646 = vadd.f32 %v524, %v616
        %v647 = vadd.f32 %v527, %v619
        %v648 = vadd.f32 %v532, %v624
        %v649 = vadd.f32 %v535, %v627
        %v650 = vadd.f32 %v540, %v632
        %v651 = vadd.f32 %v543, %v635
        %v652 = vadd.f32 %v548, %v640
        %v653 = vadd.f32 %v551, %v643
        %v655 = vshrl.u32 %v233, 16
        %v657 = vrot.slane %v655, 4
        %v658 = vshll.u32 %v233, 16
        %v660 = vrot.slane %v658, 5
        %v661 = vor.u32 %v657, %v660
        %v662 = vrot.slane %v661, 4
        %v664 = vshll.u32 %v234, 16
        %v666 = vrot.slane %v664, 5
        %v667 = vsel %vm239, %v662, %v666
        %s668 = scalar_lea.vmem [#allocation5], 24
        %v669 = vld [vmem:[%s668] sm:$0xf]
        %v670 = vld [vmem:[%s668 + $0x4] sm:$0xf]
        %v671 = vunpack.c.l.b16 %v667
        %v672 = vpack.c.b16 %v357, %v356
        %v673 = vpack.c.b16 %v359, %v358
        %v674 = vpack.c.b16 %v361, %v360
        %v675 = vpack.c.b16 %v671, %v362
        %v678 = vunpack.c.l.b16 %v669
        %v679 = vunpack.c.l.b16 %v670
        %v680 = vpack.c.b16 %v679, %v678
        %v683 = vsel %vm373, %v672, 0
        %v686 = vsel %vm373, %v673, 0
        %v689 = vsel %vm373, %v674, 0
        %v692 = vsel %vm373, %v675, 0
        %694 = vmatprep.subr.bf16.mxu0 0
        %695 = vmatpush1.bf16.msra.mxu0 %v680
        %696 = vmatprep.subr.bf16.mxu0 0
        %697 = vmatpush1.bf16.msra.mxu0 0
        %698 = vmatprep.subr.bf16.mxu0 0
        %699 = vmatpush1.bf16.msra.mxu0 0
        %700 = vmatprep.subr.bf16.mxu0 0
        %701 = vmatpush1.bf16.msra.mxu0 0
        %702 = vmatprep.subr.bf16.mxu0 0
        %703 = vmatpush1.bf16.msra.mxu0 0
        %704 = vmatprep.subr.bf16.mxu0 0
        %705 = vmatpush1.bf16.msra.mxu0 0
        %706 = vmatprep.subr.bf16.mxu0 0
        %707 = vmatpush1.bf16.msra.mxu0 0
        %708 = vmatprep.subr.bf16.mxu0 0
        %709 = vmatpush1.bf16.msra.mxu0 0
        %710 = vmatprep.subr.bf16.mxu0 0
        %711 = vmatpush1.bf16.msra.mxu0 0
        %712 = vmatprep.subr.bf16.mxu0 0
        %713 = vmatpush1.bf16.msra.mxu0 0
        %714 = vmatprep.subr.bf16.mxu0 0
        %715 = vmatpush1.bf16.msra.mxu0 0
        %716 = vmatprep.subr.bf16.mxu0 0
        %717 = vmatpush1.bf16.msra.mxu0 0
        %718 = vmatprep.subr.bf16.mxu0 0
        %719 = vmatpush1.bf16.msra.mxu0 0
        %720 = vmatprep.subr.bf16.mxu0 0
        %721 = vmatpush1.bf16.msra.mxu0 0
        %722 = vmatprep.subr.bf16.mxu0 0
        %723 = vmatpush1.bf16.msra.mxu0 0
        %724 = vmatprep.subr.bf16.mxu0 0
        %725 = vmatpush1.bf16.msra.mxu0 0
        %726 = vmatprep.mubr.bf16.mxu0 0
        %727 = vmatmul.mubr.bf16.gmra.mrb[0].mxu0 %v683
        %v728 = vpop.f32.mrb[0].mxu0
        %v729 = vadd.f32 0.0, %v728
        %v730 = vpop.f32.mrb[0].mxu0
        %v731 = vpop.f32.mrb[0].mxu0
        %v732 = vadd.f32 0.0, %v731
        %v733 = vpop.f32.mrb[0].mxu0
        %734 = vmatprep.mubr.bf16.mxu0 0
        %735 = vmatmul.mubr.bf16.gmra.mrb[0].mxu0 %v686
        %v736 = vpop.f32.mrb[0].mxu0
        %v737 = vadd.f32 0.0, %v736
        %v738 = vpop.f32.mrb[0].mxu0
        %v739 = vpop.f32.mrb[0].mxu0
        %v740 = vadd.f32 0.0, %v739
        %v741 = vpop.f32.mrb[0].mxu0
        %742 = vmatprep.mubr.bf16.mxu0 0
        %743 = vmatmul.mubr.bf16.gmra.mrb[0].mxu0 %v689
        %v744 = vpop.f32.mrb[0].mxu0
        %v745 = vadd.f32 0.0, %v744
        %v746 = vpop.f32.mrb[0].mxu0
        %v747 = vpop.f32.mrb[0].mxu0
        %v748 = vadd.f32 0.0, %v747
        %v749 = vpop.f32.mrb[0].mxu0
        %750 = vmatprep.mubr.bf16.mxu0 0
        %751 = vmatmul.mubr.bf16.gmra.mrb[0].mxu0 %v692
        %v752 = vpop.f32.mrb[0].mxu0
        %v753 = vadd.f32 0.0, %v752
        %v754 = vpop.f32.mrb[0].mxu0
        %v755 = vpop.f32.mrb[0].mxu0
        %v756 = vadd.f32 0.0, %v755
        %v757 = vpop.f32.mrb[0].mxu0
        %758 = vdwg.mxu0
        %v759 = vadd.f32 %v646, %v729
        %v760 = vadd.f32 %v647, %v732
        %v761 = vadd.f32 %v648, %v737
        %v762 = vadd.f32 %v649, %v740
        %v763 = vadd.f32 %v650, %v745
        %v764 = vadd.f32 %v651, %v748
        %v765 = vadd.f32 %v652, %v753
        %v766 = vadd.f32 %v653, %v756
        %v767 = vld [vmem:[#allocation7] sm:$0x1]
        %v769 = vlaneseq
        %v770 = vshrl.u32 %v769, 7
        %v771 = vsub.s32 0, %v770
        %v772 = vrot.slane %v767, %v771
        %v774 = vadd.f32 %v759, %v772
        %v775 = vadd.f32 %v760, %v772
        %v776 = vadd.f32 %v761, %v772
        %v777 = vadd.f32 %v762, %v772
        %v778 = vadd.f32 %v763, %v772
        %v779 = vadd.f32 %v764, %v772
        %v780 = vadd.f32 %v765, %v772
        %v781 = vadd.f32 %v766, %v772
        %782 = vst [vmem:[%s215] sm:$0xff] %v774
        %783 = vst [vmem:[%s215 + $0x8] sm:$0xff] %v775
        %784 = vst [vmem:[%s215 + $0x10] sm:$0xff] %v776
        %785 = vst [vmem:[%s215 + $0x18] sm:$0xff] %v777
        %786 = vst [vmem:[%s215 + $0x20] sm:$0xff] %v778
        %787 = vst [vmem:[%s215 + $0x28] sm:$0xff] %v779
        %788 = vst [vmem:[%s215 + $0x30] sm:$0xff] %v780
        %789 = vst [vmem:[%s215 + $0x38] sm:$0xff] %v781
        %s790 = sand.u32 %s97, 1
        %s791 = scalar_lea.sflag [#allocation4], %s790
        %s792 = sand.u32 %s97, 1
        %s793 = smul.addr %s792, 64
        %s794 = scalar_lea.vmem [#allocation8], %s793
        // Predicated region
        $region45: #{downsample_inout.1} parent=31 // pred_check
          %p795 = pneg %p107
        $region46: #{downsample_inout.1} parent=31 // pred_check_branch
          %797 = sbr.rel (%p795) target = $region48
        $region47: #{downsample_inout.1} parent=31 // pred_region
          %s799 = ssub.s32 1024, 1024
          %800 = vsyncadd %s791, %s799
          %s801 = smul.addr %s21, 8
          %s802 = smul.addr %s801, 128
          %s803 = scalar_lea.hbm %s3, %s802
          %s804 = sshll.u32 %s794, 4
          %s805 = int_to_ptr.vmem [resolvable:$true] %s804
          %810 = dma.vmem_to_hbm [thread:$0]  %s805, 1024, %s803, %s791, 128, 128, 8
        $region48: #{downsample_inout.1} parent=31 // pred_fallthru
          _
      $region32: #{downsample_inout.1} parent=5 // pred_fallthru
        _
      %p811 = scmp.le.s32.totalorder 2, %s16
      // Predicated region
      $region49: #{downsample_inout.1} parent=5 // pred_check
        %p812 = pneg %p811
      $region50: #{downsample_inout.1} parent=5 // pred_check_branch
        %814 = sbr.rel (%p812) target = $region52
      $region51: #{downsample_inout.1} parent=5 // pred_region
        %s815 = ssub.s32 %s16, 2
        // Predicated region
        $region53: #{downsample_inout.1} parent=51 // pred_check
          %p816 = pneg %p113
        $region54: #{downsample_inout.1} parent=51 // pred_check_branch
          %818 = sbr.rel (%p816) target = $region56
        $region55: #{downsample_inout.1} parent=51 // pred_region
          %s819 = sand.u32 %s98, 1
          %s820 = scalar_lea.sflag [#allocation4], %s819
          %s821 = sand.u32 %s98, 1
          %s822 = smul.addr %s821, 64
          %s823 = scalar_lea.vmem [#allocation8], %s822
          %824 = dma.done %s820, 1024
        $region56: #{downsample_inout.1} parent=51 // pred_fallthru
          _
      $region52: #{downsample_inout.1} parent=5 // pred_fallthru
        _
    $region6: #{downsample_inout.1} parent=1 // loop_footer
      %s20 = sadd.s32 1, %s16
    $region7: #{downsample_inout.1} parent=1 // loop_footer_branch
      %15 = sbr.rel target = $region3
    $region8: #{downsample_inout.1} parent=1 // loop_exit
      _
    %825 = vsyncpa [#allocation3], 1
    %s826 = scalar_lea.sflag [#allocation3], 1
    %827 = vsyncpa %s826, 1
    %828 = vsyncpa [#allocation6], 1
    %829 = vsyncpa [#allocation4], 1
    %s830 = scalar_lea.sflag [#allocation4], 1
    %831 = vsyncpa %s830, 1

</llo_original>
